<compile_context>
chip_gen: v5e
topology: v5e:2x2
jax: 0.10.0
libtpu: 0.0.40
codegen_flags: <defaults>
</compile_context>

<pallas_src>
import functools

import jax
import jax.numpy as jnp
from jax.experimental import pallas as pl
from jax.experimental.pallas import tpu as pltpu


# ---------------------------------------------------------------------------
# helpers
# ---------------------------------------------------------------------------
def _round_up(x, m):
    return ((x + m - 1) // m) * m


def _tile_and_pad(n, pref, align):
    """Return (tile, padded_n) with tile dividing padded_n and tile % align == 0."""
    if n <= pref:
        t = _round_up(max(n, 1), align)
        return t, t
    return pref, _round_up(n, pref)


def _divisor_tile(n, pref, align):
    """Largest multiple of `align` that is <= pref and divides n (n is a multiple of align)."""
    t = max(align, (min(pref, n) // align) * align)
    while n % t != 0:
        t -= align
    return t


def _pad2d(x, rows, cols, dtype):
    r, c = x.shape
    return jnp.pad(x, ((0, rows - r), (0, cols - c))).astype(dtype)


def _hw_config():
    """Generation-dependent tile preferences and scoped-VMEM budget.

    v5e / v6e: 128 MiB VMEM per core -> large tiles, ~100 MiB scoped limit.
    v7x:        64 MiB physical       -> leave headroom (~48 MiB), moderate tiles.
    """
    vmem_phys = 64 * 1024 * 1024
    try:
        info = pltpu.get_tpu_info()
        vmem_phys = int(getattr(info, "vmem_capacity_bytes", vmem_phys))
    except Exception:
        pass
    if vmem_phys >= 96 * 1024 * 1024:                       # v5e / v6e
        return dict(vmem_limit=100 * 1024 * 1024, tm_pref=1024, tk_pref=2048)
    return dict(vmem_limit=48 * 1024 * 1024, tm_pref=512, tk_pref=1024)  # v7x / unknown


def _fit_fused_tiles(tm, tk, out_pad, vmem_limit):
    """Halve (tm, tk) until the fused kernel's double-buffered working set fits the budget."""
    def ws(tm_, tk_):
        return (2 * tm_ * tk_ * 1              # int8 A tile
                + 2 * tk_ * out_pad * 2        # bf16 XW tile
                + 2 * tm_ * out_pad * 4        # f32 self-loop tile
                + 2 * tm_ * out_pad * 4        # f32 output tile
                + 2 * tm_ * out_pad * 4)       # part_acc + sum_acc scratch
    budget = int(0.7 * vmem_limit)
    while ws(tm, tk) > budget and (tm > 64 or tk > 256):
        if tk >= 2 * tm and tk > 256:
            tk //= 2
        elif tm > 64:
            tm //= 2
        else:
            tk //= 2
    return tm, tk


# ---------------------------------------------------------------------------
# Kernel 1: tiled matmul (optionally + bias), f32 accumulate
#   used for  XW_r = X_src @ W_r   (bf16 out)   and   H_loop = X_dst @ W_loop + b   (f32 out)
# ---------------------------------------------------------------------------
def _matmul_kernel(x_ref, w_ref, o_ref, acc_ref):
    @pl.when(pl.program_id(2) == 0)
    def _():
        acc_ref[...] = jnp.zeros_like(acc_ref)

    acc_ref[...] += jnp.dot(x_ref[...], w_ref[...], preferred_element_type=jnp.float32)

    @pl.when(pl.program_id(2) == pl.num_programs(2) - 1)
    def _():
        o_ref[...] = acc_ref[...].astype(o_ref.dtype)


def _matmul_bias_kernel(x_ref, w_ref, b_ref, o_ref, acc_ref):
    @pl.when(pl.program_id(2) == 0)
    def _():
        acc_ref[...] = jnp.zeros_like(acc_ref)

    acc_ref[...] += jnp.dot(x_ref[...], w_ref[...], preferred_element_type=jnp.float32)

    @pl.when(pl.program_id(2) == pl.num_programs(2) - 1)
    def _():
        o_ref[...] = (acc_ref[...] + b_ref[...]).astype(o_ref.dtype)


def tiled_matmul(x, w, *, tm, tn, tk, out_dtype, vmem_limit, bias=None):
    """x:[M,K] bf16, w:[K,N] bf16, optional bias:[1,N] f32  ->  [M,N] out_dtype."""
    M, K = x.shape
    N = w.shape[1]
    grid = (M // tm, N // tn, K // tk)
    in_specs = [pl.BlockSpec((tm, tk), lambda i, j, k: (i, k)),
                pl.BlockSpec((tk, tn), lambda i, j, k: (k, j))]
    args = (x, w)
    kernel = _matmul_kernel
    if bias is not None:
        in_specs = in_specs + [pl.BlockSpec((1, tn), lambda i, j, k: (0, j))]
        args = (x, w, bias)
        kernel = _matmul_bias_kernel
    return pl.pallas_call(
        kernel,
        out_shape=jax.ShapeDtypeStruct((M, N), out_dtype),
        grid=grid,
        in_specs=in_specs,
        out_specs=pl.BlockSpec((tm, tn), lambda i, j, k: (i, j)),
        scratch_shapes=[pltpu.VMEM((tm, tn), jnp.float32)],
        compiler_params=pltpu.CompilerParams(
            dimension_semantics=("parallel", "parallel", "arbitrary"),
            vmem_limit_bytes=vmem_limit),
    )(*args)


# ---------------------------------------------------------------------------
# Kernel 2: fused heterogeneous aggregation for ONE destination node type.
#   grid = (dst tiles, relations, src tiles), scalar-prefetched nk[r] = true #k-tiles of rel r
#   part_acc : per-relation message accumulator (over src tiles)
#   sum_acc  : seeded with H_loop (self-loop) at (r==0,k==0); running sum over relations
#   finalize : optional ReLU, store lane-dense f32
# ---------------------------------------------------------------------------
def _fused_rel_kernel(nk_ref, a_ref, xw_ref, invdeg_ref, hloop_ref, o_ref,
                      part_acc, sum_acc, *, use_relu):
    r = pl.program_id(1)
    k = pl.program_id(2)
    nr = pl.num_programs(1)
    nk_total = pl.num_programs(2)

    @pl.when((r == 0) & (k == 0))
    def _():
        # seed with the precomputed self-loop tile  X_dst @ W_loop + b  (hoisted matmul)
        sum_acc[...] = hloop_ref[...]

    @pl.when(k == 0)
    def _():
        part_acc[...] = jnp.zeros_like(part_acc)

    @pl.when(k < nk_ref[r])
    def _():
        # int8 0/1 A tile -> bf16 (exact) on the VPU, MXU dot with f32 accumulation.
        a = a_ref[...].astype(jnp.bfloat16)
        part_acc[...] += jnp.dot(a, xw_ref[...], preferred_element_type=jnp.float32)

    @pl.when(k == nk_total - 1)
    def _():
        # GraphConv(norm='right'): divide by clamp(in_degree, 1) for THIS relation via the
        # precomputed reciprocal (correct under src tiling), then sum over relations.
        sum_acc[...] += part_acc[...] * invdeg_ref[...]

    @pl.when((r == nr - 1) & (k == nk_total - 1))
    def _():
        h = sum_acc[...]
        if use_relu:
            h = jnp.maximum(h, 0.0)
        o_ref[...] = h


def fused_hetero_conv(nk, a_all, xw_all, invdeg_all, hloop, *, tm, tk, use_relu, vmem_limit):
    R, n_dst_pad, n_src_pad = a_all.shape
    out_pad = xw_all.shape[-1]
    grid = (n_dst_pad // tm, R, n_src_pad // tk)
    # Index maps clamp the k-tile to nk[r]-1 so tiles beyond a relation's true src extent
    # re-use the previous block (no new DMA); compute for them is skipped in the kernel.
    return pl.pallas_call(
        functools.partial(_fused_rel_kernel, use_relu=use_relu),
        out_shape=jax.ShapeDtypeStruct((n_dst_pad, out_pad), jnp.float32),
        grid_spec=pltpu.PrefetchScalarGridSpec(
            num_scalar_prefetch=1,
            grid=grid,
            in_specs=[
                pl.BlockSpec((None, tm, tk),                                   # A_r tile (int8)
                             lambda d, r, k, nk_r: (r, d, jnp.minimum(k, nk_r[r] - 1))),
                pl.BlockSpec((None, tk, out_pad),                              # XW_r tile (bf16)
                             lambda d, r, k, nk_r: (r, jnp.minimum(k, nk_r[r] - 1), 0)),
                pl.BlockSpec((None, tm, 1), lambda d, r, k, nk_r: (r, d, 0)),  # 1/deg_r (f32)
                pl.BlockSpec((tm, out_pad), lambda d, r, k, nk_r: (d, 0)),     # H_loop tile (f32)
            ],
            out_specs=pl.BlockSpec((tm, out_pad), lambda d, r, k, nk_r: (d, 0)),
            scratch_shapes=[pltpu.VMEM((tm, out_pad), jnp.float32),   # per-relation partial
                            pltpu.VMEM((tm, out_pad), jnp.float32)],  # running sum
        ),
        compiler_params=pltpu.CompilerParams(
            dimension_semantics=("parallel", "arbitrary", "arbitrary"),
            vmem_limit_bytes=vmem_limit),
    )(nk, a_all, xw_all, invdeg_all, hloop)


# ---------------------------------------------------------------------------
# Module wrapper
# ---------------------------------------------------------------------------
class RelGraphConvLayerPallas:

    def __init__(self, in_feat, out_feat, ntypes, canonical_etypes,
                 activation=None, dropout=0.0, key=None):
        """canonical_etypes: list of (src_type, rel_name, dst_type)."""
        self.in_feat = in_feat
        self.out_feat = out_feat
        self.ntypes = list(ntypes)
        self.canonical_etypes = list(canonical_etypes)
        self.rel_names = [r for (_, r, _) in canonical_etypes]
        self.activation = activation          # None or "relu"
        self.dropout = dropout                # 0.0 -> identity (eval semantics)
        # TODO(synk): stochastic dropout (p>0, training mode) not implemented in-kernel.

        # relations grouped by destination node type (HeteroGraphConv aggregate='sum')
        self._groups = {}
        for (src_t, rel, dst_t) in self.canonical_etypes:
            self._groups.setdefault(dst_t, []).append((src_t, rel))

        # generation-dependent tiling config
        self._cfg = _hw_config()
        self._out_pad = _round_up(out_feat, 128)
        self._tm_pref, self._tk_pref = _fit_fused_tiles(
            self._cfg["tm_pref"], self._cfg["tk_pref"], self._out_pad, self._cfg["vmem_limit"])
        self._tn = _divisor_tile(self._out_pad, 512, 128)
        self._tki, self._in_pad = _tile_and_pad(in_feat, min(self._cfg["tk_pref"], 1024), 128)

        key = jax.random.PRNGKey(0) if key is None else key
        bound = 1.0 / jnp.sqrt(jnp.float32(in_feat))     # nn.Linear default init range
        self.weight = {}        # rel_name -> (in_feat, out_feat)   (== Linear.weight.T)
        self.loop_w = {}        # ntype    -> (in_feat, out_feat)
        self.loop_b = {}        # ntype    -> (out_feat,)
        for rel in self.rel_names:
            key, k = jax.random.split(key)
            self.weight[rel] = jax.random.uniform(k, (in_feat, out_feat), jnp.float32,
                                                  -bound, bound)
        for nt in self.ntypes:
            key, k1, k2 = jax.random.split(key, 3)
            self.loop_w[nt] = jax.random.uniform(k1, (in_feat, out_feat), jnp.float32,
                                                 -bound, bound)
            self.loop_b[nt] = jax.random.uniform(k2, (out_feat,), jnp.float32,
                                                 -bound, bound)

    # ------------------------------------------------------------------
    def precompute_graph(self, adjs):
        """One-time per-graph preprocessing (reusable across forward calls with the same graph):
        cast/pad/stack adjacencies to int8 0/1, reciprocal in-degrees, per-relation k-extents."""
        prep = {}
        for dst_t, rels in self._groups.items():
            n_dst = adjs[rels[0][1]].shape[0]
            tm, n_dst_pad = _tile_and_pad(n_dst, self._tm_pref, 32)      # int8 rows: align 32
            max_src = max(adjs[rel].shape[1] for (_, rel) in rels)
            tk, n_src_pad = _tile_and_pad(max_src, self._tk_pref, 128)
            a_list, inv_list, nk_list = [], [], []
            for (_, rel) in rels:
                a = adjs[rel]                                            # [n_dst, n_src] 0/1
                deg = jnp.maximum(jnp.sum(a, axis=1, keepdims=True), 1.0)
                inv_list.append(_pad2d(1.0 / deg, n_dst_pad, 1, jnp.float32))
                a_list.append(_pad2d(a, n_dst_pad, n_src_pad, jnp.int8))  # 0/1, exact
                nk_list.append((a.shape[1] + tk - 1) // tk)               # true #k-tiles
            prep[dst_t] = dict(
                a_all=jnp.stack(a_list),                    # [R, n_dst_pad, n_src_pad] int8
                inv_all=jnp.stack(inv_list),                # [R, n_dst_pad, 1]         f32
                nk=jnp.asarray(nk_list, jnp.int32),         # [R]
                rels=rels, n_dst=n_dst, tm=tm, tk=tk,
                n_dst_pad=n_dst_pad, n_src_pad=n_src_pad)
        return prep

    # ------------------------------------------------------------------
    def __call__(self, adjs, inputs, prep=None):
        """
        adjs   : dict[rel_name] -> dense adjacency [n_dst(dst_type), n_src(src_type)] (0/1 float32)
        inputs : dict[ntype]    -> node features   [n_nodes(ntype), in_feat] float32
        prep   : optional result of precompute_graph(adjs) (reusable across calls)
        returns: dict[ntype]    -> [n_nodes(ntype), out_feat] float32 (dst types receiving messages)
        """
        if prep is None:
            prep = self.precompute_graph(adjs)

        out_pad, in_pad = self._out_pad, self._in_pad
        tn, tki = self._tn, self._tki
        vmem_limit = self._cfg["vmem_limit"]
        use_relu = (self.activation == "relu")

        out = {}
        for dst_t, g in prep.items():
            tm, tk = g["tm"], g["tk"]
            n_dst_pad, n_src_pad = g["n_dst_pad"], g["n_src_pad"]

            # ---- self-loop Linear, hoisted out of the fused kernel (tiled, bias fused) ----
            x_dst_p = _pad2d(inputs[dst_t], n_dst_pad, in_pad, jnp.bfloat16)
            w_loop_p = _pad2d(self.loop_w[dst_t], in_pad, out_pad, jnp.bfloat16)
            b_p = _pad2d(self.loop_b[dst_t].reshape(1, -1), 1, out_pad, jnp.float32)
            hloop = tiled_matmul(x_dst_p, w_loop_p, tm=tm, tn=tn, tk=tki,
                                 out_dtype=jnp.float32, bias=b_p, vmem_limit=vmem_limit)

            # ---- per-relation feature transform XW_r = X_src @ W_r at final padded shape ----
            xw_list = []
            for (src_t, rel) in g["rels"]:
                x_p = _pad2d(inputs[src_t], n_src_pad, in_pad, jnp.bfloat16)
                w_p = _pad2d(self.weight[rel], in_pad, out_pad, jnp.bfloat16)
                xw_list.append(tiled_matmul(x_p, w_p, tm=tk, tn=tn, tk=tki,
                                            out_dtype=jnp.bfloat16, vmem_limit=vmem_limit))
            xw_all = jnp.stack(xw_list)                     # [R, n_src_pad, out_pad] bf16

            # ---- fused A @ XW over all relations + self-loop seed + ReLU ----
            h = fused_hetero_conv(g["nk"], g["a_all"], xw_all, g["inv_all"], hloop,
                                  tm=tm, tk=tk, use_relu=use_relu, vmem_limit=vmem_limit)
            out[dst_t] = h[:g["n_dst"], :self.out_feat]
        return out


# ---------------------------------------------------------------------------
# Pure-jnp f32 reference for correctness checking
# ---------------------------------------------------------------------------
def _reference(layer, adjs, inputs):
    sums = {}
    for (src_t, rel, dst_t) in layer.canonical_etypes:
        a = adjs[rel]
        deg = jnp.maximum(a.sum(axis=1, keepdims=True), 1.0)
        h_r = (a @ (inputs[src_t] @ layer.weight[rel])) / deg
        sums[dst_t] = h_r if dst_t not in sums else sums[dst_t] + h_r
    out = {}
    for nt, h_sum in sums.items():
        h = h_sum + inputs[nt] @ layer.loop_w[nt] + layer.loop_b[nt][None, :]
        if layer.activation == "relu":
            h = jnp.maximum(h, 0.0)
        out[nt] = h
    return out


if __name__ == "__main__":
    key = jax.random.PRNGKey(0)

    in_feat, out_feat = 32, 16
    ntypes = ["paper", "author"]
    canonical_etypes = [("author", "writes", "paper"),
                        ("paper", "cites", "paper"),
                        ("paper", "written-by", "author")]
    n_nodes = {"paper": 48, "author": 24}

    # node features
    inputs = {}
    for nt in ntypes:
        key, k = jax.random.split(key)
        inputs[nt] = jax.random.normal(k, (n_nodes[nt], in_feat), jnp.float32)

    # random 0/1 dense adjacencies, [n_dst, n_src]
    adjs = {}
    for (src_t, rel, dst_t) in canonical_etypes:
        key, k = jax.random.split(key)
        adjs[rel] = (jax.random.uniform(k, (n_nodes[dst_t], n_nodes[src_t])) < 0.15
                     ).astype(jnp.float32)

    layer = RelGraphConvLayerPallas(in_feat, out_feat, ntypes, canonical_etypes,
                                    activation="relu", dropout=0.0,
                                    key=jax.random.PRNGKey(0))

    prep = layer.precompute_graph(adjs)       # per-graph glue, done once off the hot path
    out = layer(adjs, inputs, prep=prep)
    jax.block_until_ready(out)

    ref = _reference(layer, adjs, inputs)
    for nt in out:
        assert out[nt].shape == ref[nt].shape, f"shape mismatch for {nt}"
        # bf16 MXU inputs (f32 accumulation) -> loosen tolerance vs the pure-f32 reference.
        assert jnp.allclose(out[nt], ref[nt], atol=2e-2, rtol=2e-2), f"mismatch for {nt}"

    print("KERNEL_OK")
</pallas_src>

<mosaic_0001>
module attributes {stable_mosaic.version = 11 : i64} {
  func.func @_matmul_bias_kernel(%arg0: i32, %arg1: i32, %arg2: i32, %arg3: memref<64x128xbf16, #tpu.memory_space<vmem>>, %arg4: memref<128x128xbf16, #tpu.memory_space<vmem>>, %arg5: memref<1x128xf32, #tpu.memory_space<vmem>>, %arg6: memref<64x128xf32, #tpu.memory_space<vmem>>, %arg7: memref<64x128xf32, #tpu.memory_space<vmem>>) attributes {dimension_semantics = [#tpu.dimension_semantics<parallel>, #tpu.dimension_semantics<parallel>, #tpu.dimension_semantics<arbitrary>], iteration_bounds = array<i64: 1, 1, 1>, scalar_prefetch = 0 : i64, scratch_operands = 1 : i64, tpu.core_type = #tpu.core_type<tc>, window_params = [{transform_indices = @transform_0, window_bounds = array<i64: 64, 128>}, {transform_indices = @transform_1, window_bounds = array<i64: 128, 128>}, {transform_indices = @transform_2, window_bounds = array<i64: 1, 128>}, {transform_indices = @transform_3, window_bounds = array<i64: 64, 128>}]} {
    %c0_i32 = arith.constant 0 : i32
    %0 = arith.cmpi eq, %arg2, %c0_i32 : i32
    %1 = arith.extui %0 : i1 to i32
    %c0_i32_0 = arith.constant 0 : i32
    %2 = arith.cmpi ne, %1, %c0_i32_0 : i32
    scf.if %2 {
      %cst_10 = arith.constant 0.000000e+00 : f32
      %12 = vector.broadcast %cst_10 : f32 to vector<64x128xf32>
      %c0_11 = arith.constant 0 : index
      %c0_12 = arith.constant 0 : index
      %13 = vector.load %arg7[%c0_11, %c0_12] : memref<64x128xf32, #tpu.memory_space<vmem>>, vector<64x128xf32>
      tpu.vector_store %arg7[%c0_11, %c0_12], %12 {strides = array<i32>} : memref<64x128xf32, #tpu.memory_space<vmem>>, vector<64x128xf32>,
    } else {
    }
    %c0 = arith.constant 0 : index
    %c0_1 = arith.constant 0 : index
    %3 = vector.load %arg7[%c0, %c0_1] : memref<64x128xf32, #tpu.memory_space<vmem>>, vector<64x128xf32>
    %c0_2 = arith.constant 0 : index
    %c0_3 = arith.constant 0 : index
    %4 = vector.load %arg3[%c0_2, %c0_3] : memref<64x128xbf16, #tpu.memory_space<vmem>>, vector<64x128xbf16>
    %c0_4 = arith.constant 0 : index
    %c0_5 = arith.constant 0 : index
    %5 = vector.load %arg4[%c0_4, %c0_5] : memref<128x128xbf16, #tpu.memory_space<vmem>>, vector<128x128xbf16>
    %cst = arith.constant dense<0.000000e+00> : vector<64x128xf32>
    %6 = tpu.matmul %4, %5, %cst {dimension_numbers = #tpu.dot_dimension_numbers<[1], [0], [0], [1], [0, 0, 1, 1], [], []>} : vector<64x128xbf16>, vector<128x128xbf16>, vector<64x128xf32> -> vector<64x128xf32>
    %7 = arith.addf %3, %6 : vector<64x128xf32>
    %c0_6 = arith.constant 0 : index
    %c0_7 = arith.constant 0 : index
    %8 = vector.load %arg7[%c0_6, %c0_7] : memref<64x128xf32, #tpu.memory_space<vmem>>, vector<64x128xf32>
    tpu.vector_store %arg7[%c0_6, %c0_7], %7 {strides = array<i32>} : memref<64x128xf32, #tpu.memory_space<vmem>>, vector<64x128xf32>,
    %c0_i32_8 = arith.constant 0 : i32
    %9 = arith.cmpi eq, %arg2, %c0_i32_8 : i32
    %10 = arith.extui %9 : i1 to i32
    %c0_i32_9 = arith.constant 0 : i32
    %11 = arith.cmpi ne, %10, %c0_i32_9 : i32
    scf.if %11 {
      %c0_10 = arith.constant 0 : index
      %c0_11 = arith.constant 0 : index
      %12 = vector.load %arg7[%c0_10, %c0_11] : memref<64x128xf32, #tpu.memory_space<vmem>>, vector<64x128xf32>
      %c0_12 = arith.constant 0 : index
      %c0_13 = arith.constant 0 : index
      %13 = vector.load %arg5[%c0_12, %c0_13] : memref<1x128xf32, #tpu.memory_space<vmem>>, vector<1x128xf32>
      %14 = vector.broadcast %13 : vector<1x128xf32> to vector<64x128xf32>
      %15 = arith.addf %12, %14 : vector<64x128xf32>
      %c0_14 = arith.constant 0 : index
      %c0_15 = arith.constant 0 : index
      %16 = vector.load %arg6[%c0_14, %c0_15] : memref<64x128xf32, #tpu.memory_space<vmem>>, vector<64x128xf32>
      tpu.vector_store %arg6[%c0_14, %c0_15], %15 {strides = array<i32>} : memref<64x128xf32, #tpu.memory_space<vmem>>, vector<64x128xf32>,
    } else {
    }
    return
  }
  func.func @transform_0(%arg0: i32, %arg1: i32, %arg2: i32) -> (i32, i32) {
    %c0_i32 = arith.constant 0 : i32
    return %arg0, %arg2 : i32, i32
  }
  func.func @transform_1(%arg0: i32, %arg1: i32, %arg2: i32) -> (i32, i32) {
    %c0_i32 = arith.constant 0 : i32
    return %arg2, %arg1 : i32, i32
  }
  func.func @transform_2(%arg0: i32, %arg1: i32, %arg2: i32) -> (i32, i32) {
    %c0_i32 = arith.constant 0 : i32
    %c0_i32_0 = arith.constant 0 : i32
    return %c0_i32, %arg1 : i32, i32
  }
  func.func @transform_3(%arg0: i32, %arg1: i32, %arg2: i32) -> (i32, i32) {
    %c0_i32 = arith.constant 0 : i32
    return %arg0, %arg1 : i32, i32
  }
}

</mosaic_0001>

<llo_original>
// kernel: tpu_custom_call.1
$region0: #{tpu_custom_call.1}
  #allocation0 [shape = 'u32[]', space=smem, size = 0x4, offset = 0x4, fixed_abs, tag = 'smem constant byte address 0x4 - core index']
  #allocation1 [shape = 'u32[72,128]{1,0:T(1,128)}', space=vmem, size = 0x9000, scoped, tag = 'internal scratch']
  #allocation2 [shape = 'f32[64,128]{1,0:T(8,128)}', space=vmem, size = 0x8000, scoped, tag = 'scratch operand']
  %s0 = inlined_call_operand.hbm [shape: bf16[64,128], index: 0, kind: input, shape index: {}]
  %s1 = inlined_call_operand.hbm [shape: bf16[128,128], index: 1, kind: input, shape index: {}]
  %s2 = inlined_call_operand.vmem [shape: f32[1,128], index: 2, kind: input, shape index: {}]
  %s3 = inlined_call_operand.hbm [shape: f32[64,128], index: 3, kind: output, shape index: {}]
  %s4 = sld [smem:[#allocation0]]
  $region38: #{tpu_custom_call.1} parent=0
    _
  %s6 = ssub.s32 1, %s4
  %s7 = scalar_select 0, %s6, %s4
  $region1: #{tpu_custom_call.1} parent=0
    #allocation3 [shape = 'u8[16384]{0}', space=vmem, size = 0x4000, scoped, tag = 'input window, operand 0, single buffered']
    #allocation4 [shape = 's32[1]{0}', space=sflag, size = 0x4, scoped, tag = 'scoped memory for tpu_custom_call.1']
    #allocation5 [shape = 's32[1]{0}', space=sflag, size = 0x4, scoped, tag = 'scoped memory for tpu_custom_call.1']
    #allocation6 [shape = 'u8[32768]{0}', space=vmem, size = 0x8000, scoped, tag = 'input window, operand 1, single buffered']
    #allocation7 [shape = 's32[1]{0}', space=sflag, size = 0x4, scoped, tag = 'scoped memory for tpu_custom_call.1']
    #allocation8 [shape = 'u8[32768]{0}', space=vmem, size = 0x8000, scoped, tag = 'output window, operand 0, single buffered']
    %8 = vsyncpa [#allocation4], 0
    %9 = vsyncpa [#allocation7], 0
    %10 = vsyncpa [#allocation5], 0
    // Predicated region
    $region2: #{tpu_custom_call.1} parent=1 // pred_check
      _
    $region3: #{tpu_custom_call.1} parent=1 // pred_check_branch
      %12 = sbr.rel (0) target = $region5
    $region4: #{tpu_custom_call.1} parent=1 // pred_region
      %14 = vsyncadd [#allocation4], 0
      %s15 = sshll.u32 %s0, 4
      %s16 = int_to_ptr.hbm [resolvable:$true] %s15
      %s17 = sshll.u32 [#allocation3], 4
      %s18 = int_to_ptr.vmem [resolvable:$true] %s17
      %23 = dma.hbm_to_vmem [thread:$0]  %s16, 512, %s18, [#allocation4], 64, 64, 4
    $region5: #{tpu_custom_call.1} parent=1 // pred_fallthru
      _
    // Predicated region
    $region6: #{tpu_custom_call.1} parent=1 // pred_check
      _
    $region7: #{tpu_custom_call.1} parent=1 // pred_check_branch
      %25 = sbr.rel (0) target = $region9
    $region8: #{tpu_custom_call.1} parent=1 // pred_region
      %27 = vsyncadd [#allocation7], 0
      %s28 = sshll.u32 %s1, 4
      %s29 = int_to_ptr.hbm [resolvable:$true] %s28
      %s30 = sshll.u32 [#allocation6], 4
      %s31 = int_to_ptr.vmem [resolvable:$true] %s30
      %36 = dma.hbm_to_vmem [thread:$0]  %s29, 1024, %s31, [#allocation7], 64, 64, 4
    $region9: #{tpu_custom_call.1} parent=1 // pred_fallthru
      _
    // Predicated region
    $region10: #{tpu_custom_call.1} parent=1 // pred_check
      _
    $region11: #{tpu_custom_call.1} parent=1 // pred_check_branch
      %38 = sbr.rel (0) target = $region13
    $region12: #{tpu_custom_call.1} parent=1 // pred_region
      _
    $region13: #{tpu_custom_call.1} parent=1 // pred_fallthru
      _
    // Predicated region
    $region14: #{tpu_custom_call.1} parent=1 // pred_check
      _
    $region15: #{tpu_custom_call.1} parent=1 // pred_check_branch
      %40 = sbr.rel (0) target = $region17
    $region16: #{tpu_custom_call.1} parent=1 // pred_region
      %42 = dma.done [#allocation4], 512
    $region17: #{tpu_custom_call.1} parent=1 // pred_fallthru
      _
    // Predicated region
    $region18: #{tpu_custom_call.1} parent=1 // pred_check
      _
    $region19: #{tpu_custom_call.1} parent=1 // pred_check_branch
      %44 = sbr.rel (0) target = $region21
    $region20: #{tpu_custom_call.1} parent=1 // pred_region
      %46 = dma.done [#allocation7], 1024
    $region21: #{tpu_custom_call.1} parent=1 // pred_fallthru
      _
    %p47 = scmp.eq.s32.totalorder 0, 0
    // Predicated region
    $region22: #{tpu_custom_call.1} parent=1 // pred_check
      %p48 = pneg %p47
    $region23: #{tpu_custom_call.1} parent=1 // pred_check_branch
      %50 = sbr.rel (%p48) target = $region25
    $region24: #{tpu_custom_call.1} parent=1 // pred_region
      %51 = vst [vmem:[#allocation2] sm:$0xff] 0.0
      %52 = vst [vmem:[#allocation2 + $0x8] sm:$0xff] 0.0
      %53 = vst [vmem:[#allocation2 + $0x10] sm:$0xff] 0.0
      %54 = vst [vmem:[#allocation2 + $0x18] sm:$0xff] 0.0
      %55 = vst [vmem:[#allocation2 + $0x20] sm:$0xff] 0.0
      %56 = vst [vmem:[#allocation2 + $0x28] sm:$0xff] 0.0
      %57 = vst [vmem:[#allocation2 + $0x30] sm:$0xff] 0.0
      %58 = vst [vmem:[#allocation2 + $0x38] sm:$0xff] 0.0
    $region25: #{tpu_custom_call.1} parent=1 // pred_fallthru
      _
    %v59 = vld [vmem:[#allocation2] sm:$0xff]
    %v60 = vld [vmem:[#allocation2 + $0x8] sm:$0xff]
    %v61 = vld [vmem:[#allocation2 + $0x10] sm:$0xff]
    %v62 = vld [vmem:[#allocation2 + $0x18] sm:$0xff]
    %v63 = vld [vmem:[#allocation2 + $0x20] sm:$0xff]
    %v64 = vld [vmem:[#allocation2 + $0x28] sm:$0xff]
    %v65 = vld [vmem:[#allocation2 + $0x30] sm:$0xff]
    %v66 = vld [vmem:[#allocation2 + $0x38] sm:$0xff]
    %v67 = vld [vmem:[#allocation3] sm:$0xf]
    %v68 = vld [vmem:[#allocation3 + $0x4] sm:$0xf]
    %v69 = vld [vmem:[#allocation3 + $0x8] sm:$0xf]
    %v70 = vld [vmem:[#allocation3 + $0xc] sm:$0xf]
    %v71 = vld [vmem:[#allocation3 + $0x10] sm:$0xf]
    %v72 = vld [vmem:[#allocation3 + $0x14] sm:$0xf]
    %v73 = vld [vmem:[#allocation3 + $0x18] sm:$0xf]
    %v74 = vld [vmem:[#allocation3 + $0x1c] sm:$0xf]
    %v75 = vld [vmem:[#allocation6] sm:$0xf]
    %v76 = vld [vmem:[#allocation6 + $0x4] sm:$0xf]
    %v77 = vld [vmem:[#allocation6 + $0x8] sm:$0xf]
    %v78 = vld [vmem:[#allocation6 + $0xc] sm:$0xf]
    %v79 = vld [vmem:[#allocation6 + $0x10] sm:$0xf]
    %v80 = vld [vmem:[#allocation6 + $0x14] sm:$0xf]
    %v81 = vld [vmem:[#allocation6 + $0x18] sm:$0xf]
    %v82 = vld [vmem:[#allocation6 + $0x1c] sm:$0xf]
    %v83 = vld [vmem:[#allocation6 + $0x20] sm:$0xf]
    %v84 = vld [vmem:[#allocation6 + $0x24] sm:$0xf]
    %v85 = vld [vmem:[#allocation6 + $0x28] sm:$0xf]
    %v86 = vld [vmem:[#allocation6 + $0x2c] sm:$0xf]
    %v87 = vld [vmem:[#allocation6 + $0x30] sm:$0xf]
    %v88 = vld [vmem:[#allocation6 + $0x34] sm:$0xf]
    %v89 = vld [vmem:[#allocation6 + $0x38] sm:$0xf]
    %v90 = vld [vmem:[#allocation6 + $0x3c] sm:$0xf]
    %v99 = vunpack.c.l.b16 %v67
    %v100 = vunpack.c.l.b16 %v68
    %v101 = vunpack.c.l.b16 %v69
    %v102 = vunpack.c.l.b16 %v70
    %v103 = vunpack.c.l.b16 %v71
    %v104 = vunpack.c.l.b16 %v72
    %v105 = vunpack.c.l.b16 %v73
    %v106 = vunpack.c.l.b16 %v74
    %v107 = vpack.c.b16 %v100, %v99
    %v108 = vpack.c.b16 %v102, %v101
    %v109 = vpack.c.b16 %v104, %v103
    %v110 = vpack.c.b16 %v106, %v105
    %v131 = vunpack.c.l.b16 %v75
    %v132 = vunpack.c.l.b16 %v76
    %v133 = vunpack.c.l.b16 %v77
    %v134 = vunpack.c.l.b16 %v78
    %v135 = vunpack.c.l.b16 %v79
    %v136 = vunpack.c.l.b16 %v80
    %v137 = vunpack.c.l.b16 %v81
    %v138 = vunpack.c.l.b16 %v82
    %v139 = vunpack.c.l.b16 %v83
    %v140 = vunpack.c.l.b16 %v84
    %v141 = vunpack.c.l.b16 %v85
    %v142 = vunpack.c.l.b16 %v86
    %v143 = vunpack.c.l.b16 %v87
    %v144 = vunpack.c.l.b16 %v88
    %v145 = vunpack.c.l.b16 %v89
    %v146 = vunpack.c.l.b16 %v90
    %v147 = vpack.c.b16 %v132, %v131
    %v148 = vpack.c.b16 %v134, %v133
    %v149 = vpack.c.b16 %v136, %v135
    %v150 = vpack.c.b16 %v138, %v137
    %v151 = vpack.c.b16 %v140, %v139
    %v152 = vpack.c.b16 %v142, %v141
    %v153 = vpack.c.b16 %v144, %v143
    %v154 = vpack.c.b16 %v146, %v145
    %163 = vmatpush.bf16.msra.mxu0 %v154
    %164 = vmatpush.bf16.msra.mxu0 %v153
    %165 = vmatpush.bf16.msra.mxu0 %v152
    %166 = vmatpush.bf16.msra.mxu0 %v151
    %167 = vmatpush.bf16.msra.mxu0 %v150
    %168 = vmatpush.bf16.msra.mxu0 %v149
    %169 = vmatpush.bf16.msra.mxu0 %v148
    %170 = vmatpush.bf16.msra.mxu0 %v147
    %171 = vmatmul.bf16.gmra.mxu0 %v107
    %v172 = vpop.f32.mrf.mxu0
    %v173 = vadd.f32 0.0, %v172
    %v174 = vpop.f32.mrf.mxu0
    %v175 = vadd.f32 0.0, %v174
    %176 = vmatmul.bf16.gmra.mxu0 %v108
    %v177 = vpop.f32.mrf.mxu0
    %v178 = vadd.f32 0.0, %v177
    %v179 = vpop.f32.mrf.mxu0
    %v180 = vadd.f32 0.0, %v179
    %181 = vmatmul.bf16.gmra.mxu0 %v109
    %v182 = vpop.f32.mrf.mxu0
    %v183 = vadd.f32 0.0, %v182
    %v184 = vpop.f32.mrf.mxu0
    %v185 = vadd.f32 0.0, %v184
    %186 = vmatmul.bf16.gmra.mxu0 %v110
    %v187 = vpop.f32.mrf.mxu0
    %v188 = vadd.f32 0.0, %v187
    %v189 = vpop.f32.mrf.mxu0
    %v190 = vadd.f32 0.0, %v189
    %191 = vdwg.mxu0
    %v192 = vadd.f32 %v59, %v173
    %v193 = vadd.f32 %v60, %v175
    %v194 = vadd.f32 %v61, %v178
    %v195 = vadd.f32 %v62, %v180
    %v196 = vadd.f32 %v63, %v183
    %v197 = vadd.f32 %v64, %v185
    %v198 = vadd.f32 %v65, %v188
    %v199 = vadd.f32 %v66, %v190
    %200 = vst [vmem:[#allocation2] sm:$0xff] %v192
    %201 = vst [vmem:[#allocation2 + $0x8] sm:$0xff] %v193
    %202 = vst [vmem:[#allocation2 + $0x10] sm:$0xff] %v194
    %203 = vst [vmem:[#allocation2 + $0x18] sm:$0xff] %v195
    %204 = vst [vmem:[#allocation2 + $0x20] sm:$0xff] %v196
    %205 = vst [vmem:[#allocation2 + $0x28] sm:$0xff] %v197
    %206 = vst [vmem:[#allocation2 + $0x30] sm:$0xff] %v198
    %207 = vst [vmem:[#allocation2 + $0x38] sm:$0xff] %v199
    // Predicated region
    $region26: #{tpu_custom_call.1} parent=1 // pred_check
      %p208 = pneg %p47
    $region27: #{tpu_custom_call.1} parent=1 // pred_check_branch
      %210 = sbr.rel (%p208) target = $region29
    $region28: #{tpu_custom_call.1} parent=1 // pred_region
      %v211 = vld [vmem:[#allocation2] sm:$0xff]
      %v212 = vld [vmem:[#allocation2 + $0x8] sm:$0xff]
      %v213 = vld [vmem:[#allocation2 + $0x10] sm:$0xff]
      %v214 = vld [vmem:[#allocation2 + $0x18] sm:$0xff]
      %v215 = vld [vmem:[#allocation2 + $0x20] sm:$0xff]
      %v216 = vld [vmem:[#allocation2 + $0x28] sm:$0xff]
      %v217 = vld [vmem:[#allocation2 + $0x30] sm:$0xff]
      %v218 = vld [vmem:[#allocation2 + $0x38] sm:$0xff]
      %v219 = vld [vmem:[%s2] sm:$0x1]
      %v221 = vperm.slane %v219, 0
      %v223 = vadd.f32 %v211, %v221
      %v224 = vadd.f32 %v212, %v221
      %v225 = vadd.f32 %v213, %v221
      %v226 = vadd.f32 %v214, %v221
      %v227 = vadd.f32 %v215, %v221
      %v228 = vadd.f32 %v216, %v221
      %v229 = vadd.f32 %v217, %v221
      %v230 = vadd.f32 %v218, %v221
      %231 = vst [vmem:[#allocation8] sm:$0xff] %v223
      %232 = vst [vmem:[#allocation8 + $0x8] sm:$0xff] %v224
      %233 = vst [vmem:[#allocation8 + $0x10] sm:$0xff] %v225
      %234 = vst [vmem:[#allocation8 + $0x18] sm:$0xff] %v226
      %235 = vst [vmem:[#allocation8 + $0x20] sm:$0xff] %v227
      %236 = vst [vmem:[#allocation8 + $0x28] sm:$0xff] %v228
      %237 = vst [vmem:[#allocation8 + $0x30] sm:$0xff] %v229
      %238 = vst [vmem:[#allocation8 + $0x38] sm:$0xff] %v230
    $region29: #{tpu_custom_call.1} parent=1 // pred_fallthru
      _
    // Predicated region
    $region30: #{tpu_custom_call.1} parent=1 // pred_check
      _
    $region31: #{tpu_custom_call.1} parent=1 // pred_check_branch
      %240 = sbr.rel (0) target = $region33
    $region32: #{tpu_custom_call.1} parent=1 // pred_region
      %242 = vsyncadd [#allocation5], 0
      %s243 = sshll.u32 [#allocation8], 4
      %s244 = int_to_ptr.vmem [resolvable:$true] %s243
      %s245 = sshll.u32 %s3, 4
      %s246 = int_to_ptr.hbm [resolvable:$true] %s245
      %251 = dma.vmem_to_hbm [thread:$0]  %s244, 1024, %s246, [#allocation5], 128, 128, 8
    $region33: #{tpu_custom_call.1} parent=1 // pred_fallthru
      _
    // Predicated region
    $region34: #{tpu_custom_call.1} parent=1 // pred_check
      _
    $region35: #{tpu_custom_call.1} parent=1 // pred_check_branch
      %253 = sbr.rel (0) target = $region37
    $region36: #{tpu_custom_call.1} parent=1 // pred_region
      %255 = dma.done [#allocation5], 1024
    $region37: #{tpu_custom_call.1} parent=1 // pred_fallthru
      _
    %256 = vsyncpa [#allocation4], 1
    %257 = vsyncpa [#allocation7], 1
    %258 = vsyncpa [#allocation5], 1

</llo_original>
